<compile_context>
chip_gen: v7x
topology: tpu7x:2x2x1
jax: 0.10.0
libtpu: 0.0.40
codegen_flags: <defaults>
</compile_context>

<pallas_src>
import jax
import jax.numpy as jnp
from jax.experimental import pallas as pl
from jax.experimental.pallas import tpu as pltpu

IN_DIM = 45
HID = 128
OUT_DIM = 12
IN_PAD = 48          # input features padded to 48 lanes only (== full last dim of x_pad)
PAD_OUT = 128        # lane-dense output tile width (cols 12..127 are exact zeros)
N_BIAS_ROWS = 16     # bias block padded to a full bf16 sublane tile

# Packed-parameter row layout (all static offsets used inside the kernel).
_W1_LO, _W1_HI = 0, IN_PAD                      # (48, 128), rows 45..47 zero
_W2_LO, _W2_HI = _W1_HI, _W1_HI + HID           # (128, 128)
_W3_LO, _W3_HI = _W2_HI, _W2_HI + HID           # (128, 128)
_W4_LO, _W4_HI = _W3_HI, _W3_HI + HID           # (128, 128), cols 12..127 zero
_B_LO = _W4_HI                                  # 4 bias rows + zero padding
_P_ROWS = _B_LO + N_BIAS_ROWS                   # 448 total rows


def _round_up(n, m):
    return (n + m - 1) // m * m


def _elu(v):
    # PyTorch nn.ELU (alpha=1.0): v if v > 0 else exp(v) - 1.  Positive-branch exp may
    # overflow to inf but is discarded by the select (forward-only; no VJP through this).
    return jnp.where(v > 0.0, v, jnp.exp(v) - 1.0)


def actor_kernel(x_ref, p_ref, o_ref):
    # x_ref: (TB, 48) activation tile (compute dtype).
    # p_ref: (448, 128) packed params (compute dtype), VMEM-resident across the grid.
    # o_ref: (TB, 128) f32 lane-dense output tile.
    cdt = p_ref.dtype
    x = x_ref[...]
    w1 = p_ref[_W1_LO:_W1_HI, :]
    w2 = p_ref[_W2_LO:_W2_HI, :]
    w3 = p_ref[_W3_LO:_W3_HI, :]
    w4 = p_ref[_W4_LO:_W4_HI, :]
    b1 = p_ref[_B_LO + 0:_B_LO + 1, :].astype(jnp.float32)
    b2 = p_ref[_B_LO + 1:_B_LO + 2, :].astype(jnp.float32)
    b3 = p_ref[_B_LO + 2:_B_LO + 3, :].astype(jnp.float32)
    b4 = p_ref[_B_LO + 3:_B_LO + 4, :].astype(jnp.float32)

    # All dots take compute-dtype (bf16 by default) inputs with f32 MXU accumulation.
    h = _elu(jnp.dot(x, w1, preferred_element_type=jnp.float32) + b1)
    h = _elu(jnp.dot(h.astype(cdt), w2, preferred_element_type=jnp.float32) + b2)
    h = _elu(jnp.dot(h.astype(cdt), w3, preferred_element_type=jnp.float32) + b3)
    h = jnp.dot(h.astype(cdt), w4, preferred_element_type=jnp.float32) + b4
    # Lane-dense store: full 128-lane tile (cols 12..127 are exact zeros by construction).
    o_ref[...] = h.astype(o_ref.dtype)


def pack_params(params, dtype=jnp.bfloat16):
    """Pack 4 (W, b) pairs into one (448, 128) buffer in the compute dtype.

    Rows   0: 48  W1 (45->128), rows 45..47 zero
    Rows  48:176  W2 (128->128)
    Rows 176:304  W3 (128->128)
    Rows 304:432  W4 (128->12), cols 12..127 zero
    Rows 432:448  biases b1..b4 (one row each), rows 436..447 zero
    """
    (w1, b1), (w2, b2), (w3, b3), (w4, b4) = params
    w1p = jnp.zeros((IN_PAD, HID), jnp.float32).at[:IN_DIM, :].set(w1)
    w4p = jnp.zeros((HID, PAD_OUT), jnp.float32).at[:, :OUT_DIM].set(w4)
    bias = jnp.zeros((N_BIAS_ROWS, PAD_OUT), jnp.float32)
    bias = bias.at[0, :HID].set(b1.reshape(-1))
    bias = bias.at[1, :HID].set(b2.reshape(-1))
    bias = bias.at[2, :HID].set(b3.reshape(-1))
    bias = bias.at[3, :OUT_DIM].set(b4.reshape(-1))
    packed = jnp.concatenate(
        [w1p, w2.astype(jnp.float32), w3.astype(jnp.float32), w4p, bias], axis=0)
    assert packed.shape == (_P_ROWS, PAD_OUT)
    return packed.astype(dtype)


def _choose_tb(batch):
    # Multiple of 16 sublanes (safe for bf16 packing).  Cap 2048 rows (working set stays
    # a few MiB, far under VMEM on every generation).  For batch >= 16 aim for >= 2 grid
    # steps so the "parallel" batch axis can be split across both v7x TensorCores.
    if batch >= 16:
        tb = _round_up(pl.cdiv(batch, 2), 16)
    else:
        tb = _round_up(batch, 16)
    return min(2048, tb)


def actor_forward(x, packed, *, block_rows=None):
    """x: (B, 45) f32.  packed: (448, 128) packed params (bf16 or f32).  Returns (B, 12) f32."""
    batch = x.shape[0]
    cdt = packed.dtype
    tb = _round_up(block_rows, 16) if block_rows is not None else _choose_tb(batch)
    b_pad = _round_up(batch, tb)
    grid = (b_pad // tb,)

    # Input padded only to 48 features, in the compute dtype (small wrapper-side pad pass).
    x_pad = jnp.zeros((b_pad, IN_PAD), cdt).at[:batch, :IN_DIM].set(x.astype(cdt))

    itemsize = jnp.dtype(cdt).itemsize
    cost = pl.CostEstimate(
        flops=2 * b_pad * (IN_PAD * HID + 3 * HID * HID),
        transcendentals=3 * b_pad * HID,
        bytes_accessed=b_pad * IN_PAD * itemsize            # x in
        + _P_ROWS * PAD_OUT * itemsize                      # params in (once)
        + b_pad * PAD_OUT * 4,                              # out (f32)
    )

    out = pl.pallas_call(
        actor_kernel,
        out_shape=jax.ShapeDtypeStruct((b_pad, PAD_OUT), jnp.float32),
        grid=grid,
        in_specs=[
            pl.BlockSpec((tb, IN_PAD), lambda i: (i, 0)),
            # Whole packed-param buffer, same block every step -> stays resident in VMEM.
            pl.BlockSpec((_P_ROWS, PAD_OUT), lambda i: (0, 0)),
        ],
        out_specs=pl.BlockSpec((tb, PAD_OUT), lambda i: (i, 0)),
        compiler_params=pltpu.CompilerParams(
            dimension_semantics=("parallel",),
            vmem_limit_bytes=32 * 1024 * 1024),
        cost_estimate=cost,
    )(x_pad, packed)

    return out[:batch, :OUT_DIM]


def init_params(key):
    """Deterministic init mimicking nn.Linear default (uniform +/- 1/sqrt(fan_in)).
    Weights stored as (in_features, out_features)."""
    dims = [(IN_DIM, HID), (HID, HID), (HID, HID), (HID, OUT_DIM)]
    params = []
    for fan_in, fan_out in dims:
        key, kw, kb = jax.random.split(key, 3)
        bound = 1.0 / jnp.sqrt(fan_in)
        w = jax.random.uniform(kw, (fan_in, fan_out), jnp.float32, -bound, bound)
        b = jax.random.uniform(kb, (1, fan_out), jnp.float32, -bound, bound)
        params.append((w, b))
    return params


def reference_forward(x, params):
    h = x
    for i, (w, b) in enumerate(params):
        h = h @ w + b
        if i < len(params) - 1:
            h = jnp.where(h > 0.0, h, jnp.exp(jnp.minimum(h, 0.0)) - 1.0)
    return h


if __name__ == "__main__":
    key = jax.random.PRNGKey(0)
    key, kx = jax.random.split(key)
    batch = 8
    x = jax.random.normal(kx, (batch, IN_DIM), jnp.float32)
    params = init_params(key)
    ref = reference_forward(x, params)

    # 1) f32 compute path — strict check.
    packed_f32 = pack_params(params, dtype=jnp.float32)
    out_f32 = jax.block_until_ready(actor_forward(x, packed_f32))
    assert out_f32.shape == (batch, OUT_DIM), out_f32.shape
    assert jnp.allclose(out_f32, ref, atol=1e-4, rtol=1e-4), float(
        jnp.max(jnp.abs(out_f32 - ref)))

    # 2) bf16 deployment path (f32 accumulation) — relaxed tolerance per review.
    packed_bf16 = pack_params(params, dtype=jnp.bfloat16)
    out_bf16 = jax.block_until_ready(actor_forward(x, packed_bf16))
    assert out_bf16.shape == (batch, OUT_DIM), out_bf16.shape
    assert jnp.allclose(out_bf16, ref, atol=3e-2, rtol=3e-2), float(
        jnp.max(jnp.abs(out_bf16 - ref)))

    # 3) Multi-tile grid path (>= 2 grid steps; exercises the parallel batch axis).
    key, kx2 = jax.random.split(key)
    big_batch = 200
    xb = jax.random.normal(kx2, (big_batch, IN_DIM), jnp.float32)
    out_b = jax.block_until_ready(actor_forward(xb, packed_bf16))
    ref_b = reference_forward(xb, params)
    assert out_b.shape == (big_batch, OUT_DIM), out_b.shape
    assert jnp.allclose(out_b, ref_b, atol=3e-2, rtol=3e-2), float(
        jnp.max(jnp.abs(out_b - ref_b)))

    print("KERNEL_OK")
</pallas_src>

<mosaic_0001>
module attributes {stable_mosaic.version = 11 : i64} {
  func.func @actor_kernel(%arg0: i32, %arg1: memref<16x48xf32, #tpu.memory_space<vmem>>, %arg2: memref<448x128xf32, #tpu.memory_space<vmem>>, %arg3: memref<16x128xf32, #tpu.memory_space<vmem>>) attributes {dimension_semantics = [#tpu.dimension_semantics<parallel>], iteration_bounds = array<i64: 1>, scalar_prefetch = 0 : i64, scratch_operands = 0 : i64, tpu.core_type = #tpu.core_type<tc>, window_params = [{transform_indices = @transform_0, window_bounds = array<i64: 16, 48>}, {pipeline_mode = #tpu.pipeline_mode<synchronous>, transform_indices = @transform_1, window_bounds = array<i64: 448, 128>}, {transform_indices = @transform_2, window_bounds = array<i64: 16, 128>}]} {
    %c0 = arith.constant 0 : index
    %c0_0 = arith.constant 0 : index
    %0 = vector.load %arg1[%c0, %c0_0] : memref<16x48xf32, #tpu.memory_space<vmem>>, vector<16x48xf32>
    %c0_1 = arith.constant 0 : index
    %c0_2 = arith.constant 0 : index
    %1 = vector.load %arg2[%c0_1, %c0_2] : memref<448x128xf32, #tpu.memory_space<vmem>>, vector<48x128xf32>
    %c48 = arith.constant 48 : index
    %c0_3 = arith.constant 0 : index
    %2 = vector.load %arg2[%c48, %c0_3] : memref<448x128xf32, #tpu.memory_space<vmem>>, vector<128x128xf32>
    %c176 = arith.constant 176 : index
    %c0_4 = arith.constant 0 : index
    %3 = vector.load %arg2[%c176, %c0_4] : memref<448x128xf32, #tpu.memory_space<vmem>>, vector<128x128xf32>
    %c304 = arith.constant 304 : index
    %c0_5 = arith.constant 0 : index
    %4 = vector.load %arg2[%c304, %c0_5] : memref<448x128xf32, #tpu.memory_space<vmem>>, vector<128x128xf32>
    %c432 = arith.constant 432 : index
    %c0_6 = arith.constant 0 : index
    %5 = vector.load %arg2[%c432, %c0_6] : memref<448x128xf32, #tpu.memory_space<vmem>>, vector<1x128xf32>
    %c433 = arith.constant 433 : index
    %c0_7 = arith.constant 0 : index
    %6 = vector.load %arg2[%c433, %c0_7] : memref<448x128xf32, #tpu.memory_space<vmem>>, vector<1x128xf32>
    %c434 = arith.constant 434 : index
    %c0_8 = arith.constant 0 : index
    %7 = vector.load %arg2[%c434, %c0_8] : memref<448x128xf32, #tpu.memory_space<vmem>>, vector<1x128xf32>
    %c435 = arith.constant 435 : index
    %c0_9 = arith.constant 0 : index
    %8 = vector.load %arg2[%c435, %c0_9] : memref<448x128xf32, #tpu.memory_space<vmem>>, vector<1x128xf32>
    %cst = arith.constant dense<0.000000e+00> : vector<16x128xf32>
    %9 = tpu.matmul %0, %1, %cst {dimension_numbers = #tpu.dot_dimension_numbers<[1], [0], [0], [1], [0, 0, 1, 1], [], []>} : vector<16x48xf32>, vector<48x128xf32>, vector<16x128xf32> -> vector<16x128xf32>
    %10 = vector.broadcast %5 : vector<1x128xf32> to vector<16x128xf32>
    %11 = arith.addf %9, %10 : vector<16x128xf32>
    %cst_10 = arith.constant 0.000000e+00 : f32
    %12 = vector.broadcast %cst_10 : f32 to vector<16x128xf32>
    %13 = arith.cmpf ogt, %11, %12 : vector<16x128xf32>
    %14 = math.exp %11 : vector<16x128xf32>
    %cst_11 = arith.constant 1.000000e+00 : f32
    %15 = vector.broadcast %cst_11 : f32 to vector<16x128xf32>
    %16 = arith.subf %14, %15 : vector<16x128xf32>
    %17 = arith.select %13, %11, %16 : vector<16x128xi1>, vector<16x128xf32>
    %cst_12 = arith.constant dense<0.000000e+00> : vector<16x128xf32>
    %18 = tpu.matmul %17, %2, %cst_12 {dimension_numbers = #tpu.dot_dimension_numbers<[1], [0], [0], [1], [0, 0, 1, 1], [], []>} : vector<16x128xf32>, vector<128x128xf32>, vector<16x128xf32> -> vector<16x128xf32>
    %19 = vector.broadcast %6 : vector<1x128xf32> to vector<16x128xf32>
    %20 = arith.addf %18, %19 : vector<16x128xf32>
    %cst_13 = arith.constant 0.000000e+00 : f32
    %21 = vector.broadcast %cst_13 : f32 to vector<16x128xf32>
    %22 = arith.cmpf ogt, %20, %21 : vector<16x128xf32>
    %23 = math.exp %20 : vector<16x128xf32>
    %cst_14 = arith.constant 1.000000e+00 : f32
    %24 = vector.broadcast %cst_14 : f32 to vector<16x128xf32>
    %25 = arith.subf %23, %24 : vector<16x128xf32>
    %26 = arith.select %22, %20, %25 : vector<16x128xi1>, vector<16x128xf32>
    %cst_15 = arith.constant dense<0.000000e+00> : vector<16x128xf32>
    %27 = tpu.matmul %26, %3, %cst_15 {dimension_numbers = #tpu.dot_dimension_numbers<[1], [0], [0], [1], [0, 0, 1, 1], [], []>} : vector<16x128xf32>, vector<128x128xf32>, vector<16x128xf32> -> vector<16x128xf32>
    %28 = vector.broadcast %7 : vector<1x128xf32> to vector<16x128xf32>
    %29 = arith.addf %27, %28 : vector<16x128xf32>
    %cst_16 = arith.constant 0.000000e+00 : f32
    %30 = vector.broadcast %cst_16 : f32 to vector<16x128xf32>
    %31 = arith.cmpf ogt, %29, %30 : vector<16x128xf32>
    %32 = math.exp %29 : vector<16x128xf32>
    %cst_17 = arith.constant 1.000000e+00 : f32
    %33 = vector.broadcast %cst_17 : f32 to vector<16x128xf32>
    %34 = arith.subf %32, %33 : vector<16x128xf32>
    %35 = arith.select %31, %29, %34 : vector<16x128xi1>, vector<16x128xf32>
    %cst_18 = arith.constant dense<0.000000e+00> : vector<16x128xf32>
    %36 = tpu.matmul %35, %4, %cst_18 {dimension_numbers = #tpu.dot_dimension_numbers<[1], [0], [0], [1], [0, 0, 1, 1], [], []>} : vector<16x128xf32>, vector<128x128xf32>, vector<16x128xf32> -> vector<16x128xf32>
    %37 = vector.broadcast %8 : vector<1x128xf32> to vector<16x128xf32>
    %38 = arith.addf %36, %37 : vector<16x128xf32>
    %c0_19 = arith.constant 0 : index
    %c0_20 = arith.constant 0 : index
    %39 = vector.load %arg3[%c0_19, %c0_20] : memref<16x128xf32, #tpu.memory_space<vmem>>, vector<16x128xf32>
    tpu.vector_store %arg3[%c0_19, %c0_20], %38 {strides = array<i32>} : memref<16x128xf32, #tpu.memory_space<vmem>>, vector<16x128xf32>,
    return
  }
  func.func @transform_0(%arg0: i32) -> (i32, i32) {
    %c0_i32 = arith.constant 0 : i32
    %c0_i32_0 = arith.constant 0 : i32
    return %arg0, %c0_i32 : i32, i32
  }
  func.func @transform_1(%arg0: i32) -> (i32, i32) {
    %c0_i32 = arith.constant 0 : i32
    %c0_i32_0 = arith.constant 0 : i32
    %c0_i32_1 = arith.constant 0 : i32
    return %c0_i32, %c0_i32_0 : i32, i32
  }
  func.func @transform_2(%arg0: i32) -> (i32, i32) {
    %c0_i32 = arith.constant 0 : i32
    %c0_i32_0 = arith.constant 0 : i32
    return %arg0, %c0_i32 : i32, i32
  }
}

</mosaic_0001>

<llo_original>
// kernel: tpu_custom_call.1
$region0: #{tpu_custom_call.1}
  #allocation0 [shape = 'u32[]', space=smem, size = 0x4, offset = 0x4, fixed_abs, tag = 'smem constant byte address 0x4 - core index']
  #allocation1 [shape = 'u32[144,128]{1,0:T(1,128)}', space=vmem, size = 0x12000, scoped, tag = 'internal scratch']
  %s0 = inlined_call_operand.hbm [shape: f32[16,48], index: 0, kind: input, shape index: {}]
  %s1 = inlined_call_operand.hbm [shape: f32[448,128], index: 1, kind: input, shape index: {}]
  %s2 = inlined_call_operand.hbm [shape: f32[16,128], index: 2, kind: output, shape index: {}]
  %s3 = sld [smem:[#allocation0]]
  $region26: #{tpu_custom_call.1} parent=0
    _
  %s5 = ssub.s32 1, %s3
  %s6 = scalar_select 0, %s5, %s3
  $region1: #{tpu_custom_call.1} parent=0
    #allocation2 [shape = 'u8[8192]{0}', space=vmem, size = 0x2000, scoped, tag = 'input window, operand 0, single buffered']
    #allocation3 [shape = 's32[1]{0}', space=sflag, size = 0x4, scoped, tag = 'scoped memory for tpu_custom_call.1']
    #allocation4 [shape = 's32[1]{0}', space=sflag, size = 0x4, scoped, tag = 'scoped memory for tpu_custom_call.1']
    #allocation5 [shape = 'u8[229376]{0}', space=vmem, size = 0x38000, scoped, tag = 'input window, operand 1, single buffered']
    #allocation6 [shape = 's32[1]{0}', space=sflag, size = 0x4, scoped, tag = 'scoped memory for tpu_custom_call.1']
    #allocation7 [shape = 'u8[8192]{0}', space=vmem, size = 0x2000, scoped, tag = 'output window, operand 0, single buffered']
    %7 = vsyncpa [#allocation3], 0
    %8 = vsyncpa [#allocation6], 0
    %9 = vsyncpa [#allocation4], 0
    // Predicated region
    $region2: #{tpu_custom_call.1} parent=1 // pred_check
      _
    $region3: #{tpu_custom_call.1} parent=1 // pred_check_branch
      %11 = sbr.rel (0) target = $region5
    $region4: #{tpu_custom_call.1} parent=1 // pred_region
      %s13 = ssub.s32 256, 256
      %14 = vsyncadd [#allocation3], %s13
      %s15 = sshll.u32 [#allocation2], 4
      %s16 = int_to_ptr.vmem [resolvable:$true] %s15
      %21 = dma.hbm_to_vmem [thread:$0]  %s0, 256, %s16, [#allocation3], 128, 128, 8
    $region5: #{tpu_custom_call.1} parent=1 // pred_fallthru
      _
    // Predicated region
    $region6: #{tpu_custom_call.1} parent=1 // pred_check
      _
    $region7: #{tpu_custom_call.1} parent=1 // pred_check_branch
      %23 = sbr.rel (0) target = $region9
    $region8: #{tpu_custom_call.1} parent=1 // pred_region
      %s25 = ssub.s32 7168, 7168
      %26 = vsyncadd [#allocation6], %s25
      %s27 = sshll.u32 [#allocation5], 4
      %s28 = int_to_ptr.vmem [resolvable:$true] %s27
      %33 = dma.hbm_to_vmem [thread:$0]  %s1, 7168, %s28, [#allocation6], 128, 128, 8
    $region9: #{tpu_custom_call.1} parent=1 // pred_fallthru
      _
    // Predicated region
    $region10: #{tpu_custom_call.1} parent=1 // pred_check
      _
    $region11: #{tpu_custom_call.1} parent=1 // pred_check_branch
      %35 = sbr.rel (0) target = $region13
    $region12: #{tpu_custom_call.1} parent=1 // pred_region
      %36 = dma.done [#allocation3], 256
    $region13: #{tpu_custom_call.1} parent=1 // pred_fallthru
      _
    // Predicated region
    $region14: #{tpu_custom_call.1} parent=1 // pred_check
      _
    $region15: #{tpu_custom_call.1} parent=1 // pred_check_branch
      %38 = sbr.rel (0) target = $region17
    $region16: #{tpu_custom_call.1} parent=1 // pred_region
      %39 = dma.done [#allocation6], 7168
    $region17: #{tpu_custom_call.1} parent=1 // pred_fallthru
      _
    %v40 = vld [vmem:[#allocation2] sm:$0xff]
    %v41 = vld [vmem:[#allocation2 + $0x8] sm:$0xff]
    %v42 = vld [vmem:[#allocation5] sm:$0xff]
    %v43 = vld [vmem:[#allocation5 + $0x8] sm:$0xff]
    %v44 = vld [vmem:[#allocation5 + $0x10] sm:$0xff]
    %v45 = vld [vmem:[#allocation5 + $0x18] sm:$0xff]
    %v46 = vld [vmem:[#allocation5 + $0x20] sm:$0xff]
    %v47 = vld [vmem:[#allocation5 + $0x28] sm:$0xff]
    %v48 = vld [vmem:[#allocation5 + $0x30] sm:$0xff]
    %v49 = vld [vmem:[#allocation5 + $0x38] sm:$0xff]
    %v50 = vld [vmem:[#allocation5 + $0x40] sm:$0xff]
    %v51 = vld [vmem:[#allocation5 + $0x48] sm:$0xff]
    %v52 = vld [vmem:[#allocation5 + $0x50] sm:$0xff]
    %v53 = vld [vmem:[#allocation5 + $0x58] sm:$0xff]
    %v54 = vld [vmem:[#allocation5 + $0x60] sm:$0xff]
    %v55 = vld [vmem:[#allocation5 + $0x68] sm:$0xff]
    %v56 = vld [vmem:[#allocation5 + $0x70] sm:$0xff]
    %v57 = vld [vmem:[#allocation5 + $0x78] sm:$0xff]
    %v58 = vld [vmem:[#allocation5 + $0x80] sm:$0xff]
    %v59 = vld [vmem:[#allocation5 + $0x88] sm:$0xff]
    %v60 = vld [vmem:[#allocation5 + $0x90] sm:$0xff]
    %v61 = vld [vmem:[#allocation5 + $0x98] sm:$0xff]
    %v62 = vld [vmem:[#allocation5 + $0xa0] sm:$0xff]
    %v63 = vld [vmem:[#allocation5 + $0xa8] sm:$0xff]
    %v64 = vld [vmem:[#allocation5 + $0xb0] sm:$0xff]
    %v65 = vld [vmem:[#allocation5 + $0xb8] sm:$0xff]
    %v66 = vld [vmem:[#allocation5 + $0xc0] sm:$0xff]
    %v67 = vld [vmem:[#allocation5 + $0xc8] sm:$0xff]
    %v68 = vld [vmem:[#allocation5 + $0xd0] sm:$0xff]
    %v69 = vld [vmem:[#allocation5 + $0xd8] sm:$0xff]
    %v70 = vld [vmem:[#allocation5 + $0xe0] sm:$0xff]
    %v71 = vld [vmem:[#allocation5 + $0xe8] sm:$0xff]
    %v72 = vld [vmem:[#allocation5 + $0xf0] sm:$0xff]
    %v73 = vld [vmem:[#allocation5 + $0xf8] sm:$0xff]
    %v74 = vld [vmem:[#allocation5 + $0x100] sm:$0xff]
    %v75 = vld [vmem:[#allocation5 + $0x108] sm:$0xff]
    %v76 = vld [vmem:[#allocation5 + $0x110] sm:$0xff]
    %v77 = vld [vmem:[#allocation5 + $0x118] sm:$0xff]
    %v78 = vld [vmem:[#allocation5 + $0x120] sm:$0xff]
    %v79 = vld [vmem:[#allocation5 + $0x128] sm:$0xff]
    %v80 = vld [vmem:[#allocation5 + $0x130] sm:$0xff]
    %v81 = vld [vmem:[#allocation5 + $0x138] sm:$0xff]
    %v82 = vld [vmem:[#allocation5 + $0x140] sm:$0xff]
    %v83 = vld [vmem:[#allocation5 + $0x148] sm:$0xff]
    %v84 = vld [vmem:[#allocation5 + $0x150] sm:$0xff]
    %v85 = vld [vmem:[#allocation5 + $0x158] sm:$0xff]
    %v86 = vld [vmem:[#allocation5 + $0x160] sm:$0xff]
    %v87 = vld [vmem:[#allocation5 + $0x168] sm:$0xff]
    %v88 = vld [vmem:[#allocation5 + $0x170] sm:$0xff]
    %v89 = vld [vmem:[#allocation5 + $0x178] sm:$0xff]
    %v90 = vld [vmem:[#allocation5 + $0x180] sm:$0xff]
    %v91 = vld [vmem:[#allocation5 + $0x188] sm:$0xff]
    %v92 = vld [vmem:[#allocation5 + $0x190] sm:$0xff]
    %v93 = vld [vmem:[#allocation5 + $0x198] sm:$0xff]
    %v94 = vld [vmem:[#allocation5 + $0x1a0] sm:$0xff]
    %v95 = vld [vmem:[#allocation5 + $0x1a8] sm:$0xff]
    %v96 = vld [vmem:[#allocation5 + $0x1b0] sm:$0x1]
    %v97 = vld [vmem:[#allocation5 + $0x1b1] sm:$0x1]
    %v98 = vld [vmem:[#allocation5 + $0x1b2] sm:$0x1]
    %v99 = vld [vmem:[#allocation5 + $0x1b3] sm:$0x1]
    %v100 = vlaneseq
    %v101 = vshrl.u32 %v100, 7
    %v102 = vsub.s32 0, %v101
    %v103 = vrot.slane %v96, %v102
    %vm104 = vcmask 392192
    %v106 = vsel %vm104, %v40, 0
    %v109 = vsel %vm104, %v41, 0
    %111 = vmatprep.subr.mxu0 0.0
    %112 = vmatpush1.msra.mxu0 %v42
    %113 = vmatprep.subr.mxu0 0.0
    %114 = vmatpush1.msra.mxu0 %v43
    %115 = vmatprep.subr.mxu0 0.0
    %116 = vmatpush1.msra.mxu0 %v44
    %117 = vmatprep.subr.mxu0 0.0
    %118 = vmatpush1.msra.mxu0 %v45
    %119 = vmatprep.subr.mxu0 0.0
    %120 = vmatpush1.msra.mxu0 %v46
    %121 = vmatprep.subr.mxu0 0.0
    %122 = vmatpush1.msra.mxu0 %v47
    %123 = vmatprep.subr.mxu0 0.0
    %124 = vmatpush1.msra.mxu0 0.0
    %125 = vmatprep.subr.mxu0 0.0
    %126 = vmatpush1.msra.mxu0 0.0
    %127 = vmatprep.subr.mxu0 0.0
    %128 = vmatpush1.msra.mxu0 0.0
    %129 = vmatprep.subr.mxu0 0.0
    %130 = vmatpush1.msra.mxu0 0.0
    %131 = vmatprep.subr.mxu0 0.0
    %132 = vmatpush1.msra.mxu0 0.0
    %133 = vmatprep.subr.mxu0 0.0
    %134 = vmatpush1.msra.mxu0 0.0
    %135 = vmatprep.subr.mxu0 0.0
    %136 = vmatpush1.msra.mxu0 0.0
    %137 = vmatprep.subr.mxu0 0.0
    %138 = vmatpush1.msra.mxu0 0.0
    %139 = vmatprep.subr.mxu0 0.0
    %140 = vmatpush1.msra.mxu0 0.0
    %141 = vmatprep.subr.mxu0 0.0
    %142 = vmatpush1.msra.mxu0 0.0
    %143 = vmatprep.subr.mxu0 0.0
    %144 = vmatpush1.msra.mxu0 0.0
    %145 = vmatprep.subr.mxu0 0.0
    %146 = vmatpush1.msra.mxu0 0.0
    %147 = vmatprep.subr.mxu0 0.0
    %148 = vmatpush1.msra.mxu0 0.0
    %149 = vmatprep.subr.mxu0 0.0
    %150 = vmatpush1.msra.mxu0 0.0
    %151 = vmatprep.subr.mxu0 0.0
    %152 = vmatpush1.msra.mxu0 0.0
    %153 = vmatprep.subr.mxu0 0.0
    %154 = vmatpush1.msra.mxu0 0.0
    %155 = vmatprep.subr.mxu0 0.0
    %156 = vmatpush1.msra.mxu0 0.0
    %157 = vmatprep.subr.mxu0 0.0
    %158 = vmatpush1.msra.mxu0 0.0
    %159 = vmatprep.subr.mxu0 0.0
    %160 = vmatpush1.msra.mxu0 0.0
    %161 = vmatprep.subr.mxu0 0.0
    %162 = vmatpush1.msra.mxu0 0.0
    %163 = vmatprep.subr.mxu0 0.0
    %164 = vmatpush1.msra.mxu0 0.0
    %165 = vmatprep.subr.mxu0 0.0
    %166 = vmatpush1.msra.mxu0 0.0
    %167 = vmatprep.subr.mxu0 0.0
    %168 = vmatpush1.msra.mxu0 0.0
    %169 = vmatprep.subr.mxu0 0.0
    %170 = vmatpush1.msra.mxu0 0.0
    %171 = vmatprep.subr.mxu0 0.0
    %172 = vmatpush1.msra.mxu0 0.0
    %173 = vmatprep.subr.mxu0 0.0
    %174 = vmatpush1.msra.mxu0 0.0
    %175 = vmatprep.mubr.f32.mxu0 0.0
    %176 = vmatmul.mubr.f32.gmra.mrb[0].mxu0 %v106
    %v177 = vpop.f32.mrb[0].mxu0
    %v178 = vadd.f32 %v103, %v177
    %v179 = vpop.f32.mrb[0].mxu0
    %180 = vmatprep.mubr.f32.mxu0 0.0
    %181 = vmatmul.mubr.f32.gmra.mrb[0].mxu0 %v109
    %v182 = vpop.f32.mrb[0].mxu0
    %v183 = vadd.f32 %v103, %v182
    %v184 = vpop.f32.mrb[0].mxu0
    %185 = vdwg.mxu0
    %vm186 = vcmp.gt.f32.partialorder %v178, 0.0
    %vm187 = vcmp.gt.f32.partialorder %v183, 0.0
    %v188 = vmul.f32 %v178, 1.442695
    %v189 = vpow.pop %v188
    %v190 = vmul.f32 %v183, 1.442695
    %v191 = vpow.pop %v190
    %v192 = vsub.f32 %v189, 1.0
    %v193 = vsub.f32 %v191, 1.0
    %v194 = vsel %vm186, %v178, %v192
    %v195 = vsel %vm187, %v183, %v193
    %v196 = vlaneseq
    %v197 = vshrl.u32 %v196, 7
    %v198 = vsub.s32 0, %v197
    %v199 = vrot.slane %v97, %v198
    %200 = vmatprep.subr.mxu0 0.0
    %201 = vmatpush1.msra.mxu0 %v48
    %202 = vmatprep.subr.mxu0 0.0
    %203 = vmatpush1.msra.mxu0 %v49
    %204 = vmatprep.subr.mxu0 0.0
    %205 = vmatpush1.msra.mxu0 %v50
    %206 = vmatprep.subr.mxu0 0.0
    %207 = vmatpush1.msra.mxu0 %v51
    %208 = vmatprep.subr.mxu0 0.0
    %209 = vmatpush1.msra.mxu0 %v52
    %210 = vmatprep.subr.mxu0 0.0
    %211 = vmatpush1.msra.mxu0 %v53
    %212 = vmatprep.subr.mxu0 0.0
    %213 = vmatpush1.msra.mxu0 %v54
    %214 = vmatprep.subr.mxu0 0.0
    %215 = vmatpush1.msra.mxu0 %v55
    %216 = vmatprep.subr.mxu0 0.0
    %217 = vmatpush1.msra.mxu0 %v56
    %218 = vmatprep.subr.mxu0 0.0
    %219 = vmatpush1.msra.mxu0 %v57
    %220 = vmatprep.subr.mxu0 0.0
    %221 = vmatpush1.msra.mxu0 %v58
    %222 = vmatprep.subr.mxu0 0.0
    %223 = vmatpush1.msra.mxu0 %v59
    %224 = vmatprep.subr.mxu0 0.0
    %225 = vmatpush1.msra.mxu0 %v60
    %226 = vmatprep.subr.mxu0 0.0
    %227 = vmatpush1.msra.mxu0 %v61
    %228 = vmatprep.subr.mxu0 0.0
    %229 = vmatpush1.msra.mxu0 %v62
    %230 = vmatprep.subr.mxu0 0.0
    %231 = vmatpush1.msra.mxu0 %v63
    %232 = vmatprep.subr.mxu0 0.0
    %233 = vmatpush1.msra.mxu0 0.0
    %234 = vmatprep.subr.mxu0 0.0
    %235 = vmatpush1.msra.mxu0 0.0
    %236 = vmatprep.subr.mxu0 0.0
    %237 = vmatpush1.msra.mxu0 0.0
    %238 = vmatprep.subr.mxu0 0.0
    %239 = vmatpush1.msra.mxu0 0.0
    %240 = vmatprep.subr.mxu0 0.0
    %241 = vmatpush1.msra.mxu0 0.0
    %242 = vmatprep.subr.mxu0 0.0
    %243 = vmatpush1.msra.mxu0 0.0
    %244 = vmatprep.subr.mxu0 0.0
    %245 = vmatpush1.msra.mxu0 0.0
    %246 = vmatprep.subr.mxu0 0.0
    %247 = vmatpush1.msra.mxu0 0.0
    %248 = vmatprep.subr.mxu0 0.0
    %249 = vmatpush1.msra.mxu0 0.0
    %250 = vmatprep.subr.mxu0 0.0
    %251 = vmatpush1.msra.mxu0 0.0
    %252 = vmatprep.subr.mxu0 0.0
    %253 = vmatpush1.msra.mxu0 0.0
    %254 = vmatprep.subr.mxu0 0.0
    %255 = vmatpush1.msra.mxu0 0.0
    %256 = vmatprep.subr.mxu0 0.0
    %257 = vmatpush1.msra.mxu0 0.0
    %258 = vmatprep.subr.mxu0 0.0
    %259 = vmatpush1.msra.mxu0 0.0
    %260 = vmatprep.subr.mxu0 0.0
    %261 = vmatpush1.msra.mxu0 0.0
    %262 = vmatprep.subr.mxu0 0.0
    %263 = vmatpush1.msra.mxu0 0.0
    %264 = vmatprep.mubr.f32.mxu0 0.0
    %265 = vmatmul.mubr.f32.gmra.mrb[0].mxu0 %v194
    %v266 = vpop.f32.mrb[0].mxu0
    %v267 = vadd.f32 %v199, %v266
    %v268 = vpop.f32.mrb[0].mxu0
    %269 = vmatprep.mubr.f32.mxu0 0.0
    %270 = vmatmul.mubr.f32.gmra.mrb[0].mxu0 %v195
    %v271 = vpop.f32.mrb[0].mxu0
    %v272 = vadd.f32 %v199, %v271
    %v273 = vpop.f32.mrb[0].mxu0
    %274 = vdwg.mxu0
    %vm275 = vcmp.gt.f32.partialorder %v267, 0.0
    %vm276 = vcmp.gt.f32.partialorder %v272, 0.0
    %v277 = vmul.f32 %v267, 1.442695
    %v278 = vpow.pop %v277
    %v279 = vmul.f32 %v272, 1.442695
    %v280 = vpow.pop %v279
    %v281 = vsub.f32 %v278, 1.0
    %v282 = vsub.f32 %v280, 1.0
    %v283 = vsel %vm275, %v267, %v281
    %v284 = vsel %vm276, %v272, %v282
    %v285 = vlaneseq
    %v286 = vshrl.u32 %v285, 7
    %v287 = vsub.s32 0, %v286
    %v288 = vrot.slane %v98, %v287
    %289 = vmatprep.subr.mxu0 0.0
    %290 = vmatpush1.msra.mxu0 %v64
    %291 = vmatprep.subr.mxu0 0.0
    %292 = vmatpush1.msra.mxu0 %v65
    %293 = vmatprep.subr.mxu0 0.0
    %294 = vmatpush1.msra.mxu0 %v66
    %295 = vmatprep.subr.mxu0 0.0
    %296 = vmatpush1.msra.mxu0 %v67
    %297 = vmatprep.subr.mxu0 0.0
    %298 = vmatpush1.msra.mxu0 %v68
    %299 = vmatprep.subr.mxu0 0.0
    %300 = vmatpush1.msra.mxu0 %v69
    %301 = vmatprep.subr.mxu0 0.0
    %302 = vmatpush1.msra.mxu0 %v70
    %303 = vmatprep.subr.mxu0 0.0
    %304 = vmatpush1.msra.mxu0 %v71
    %305 = vmatprep.subr.mxu0 0.0
    %306 = vmatpush1.msra.mxu0 %v72
    %307 = vmatprep.subr.mxu0 0.0
    %308 = vmatpush1.msra.mxu0 %v73
    %309 = vmatprep.subr.mxu0 0.0
    %310 = vmatpush1.msra.mxu0 %v74
    %311 = vmatprep.subr.mxu0 0.0
    %312 = vmatpush1.msra.mxu0 %v75
    %313 = vmatprep.subr.mxu0 0.0
    %314 = vmatpush1.msra.mxu0 %v76
    %315 = vmatprep.subr.mxu0 0.0
    %316 = vmatpush1.msra.mxu0 %v77
    %317 = vmatprep.subr.mxu0 0.0
    %318 = vmatpush1.msra.mxu0 %v78
    %319 = vmatprep.subr.mxu0 0.0
    %320 = vmatpush1.msra.mxu0 %v79
    %321 = vmatprep.subr.mxu0 0.0
    %322 = vmatpush1.msra.mxu0 0.0
    %323 = vmatprep.subr.mxu0 0.0
    %324 = vmatpush1.msra.mxu0 0.0
    %325 = vmatprep.subr.mxu0 0.0
    %326 = vmatpush1.msra.mxu0 0.0
    %327 = vmatprep.subr.mxu0 0.0
    %328 = vmatpush1.msra.mxu0 0.0
    %329 = vmatprep.subr.mxu0 0.0
    %330 = vmatpush1.msra.mxu0 0.0
    %331 = vmatprep.subr.mxu0 0.0
    %332 = vmatpush1.msra.mxu0 0.0
    %333 = vmatprep.subr.mxu0 0.0
    %334 = vmatpush1.msra.mxu0 0.0
    %335 = vmatprep.subr.mxu0 0.0
    %336 = vmatpush1.msra.mxu0 0.0
    %337 = vmatprep.subr.mxu0 0.0
    %338 = vmatpush1.msra.mxu0 0.0
    %339 = vmatprep.subr.mxu0 0.0
    %340 = vmatpush1.msra.mxu0 0.0
    %341 = vmatprep.subr.mxu0 0.0
    %342 = vmatpush1.msra.mxu0 0.0
    %343 = vmatprep.subr.mxu0 0.0
    %344 = vmatpush1.msra.mxu0 0.0
    %345 = vmatprep.subr.mxu0 0.0
    %346 = vmatpush1.msra.mxu0 0.0
    %347 = vmatprep.subr.mxu0 0.0
    %348 = vmatpush1.msra.mxu0 0.0
    %349 = vmatprep.subr.mxu0 0.0
    %350 = vmatpush1.msra.mxu0 0.0
    %351 = vmatprep.subr.mxu0 0.0
    %352 = vmatpush1.msra.mxu0 0.0
    %353 = vmatprep.mubr.f32.mxu0 0.0
    %354 = vmatmul.mubr.f32.gmra.mrb[0].mxu0 %v283
    %v355 = vpop.f32.mrb[0].mxu0
    %v356 = vadd.f32 %v288, %v355
    %v357 = vpop.f32.mrb[0].mxu0
    %358 = vmatprep.mubr.f32.mxu0 0.0
    %359 = vmatmul.mubr.f32.gmra.mrb[0].mxu0 %v284
    %v360 = vpop.f32.mrb[0].mxu0
    %v361 = vadd.f32 %v288, %v360
    %v362 = vpop.f32.mrb[0].mxu0
    %363 = vdwg.mxu0
    %vm364 = vcmp.gt.f32.partialorder %v356, 0.0
    %vm365 = vcmp.gt.f32.partialorder %v361, 0.0
    %v366 = vmul.f32 %v356, 1.442695
    %v367 = vpow.pop %v366
    %v368 = vmul.f32 %v361, 1.442695
    %v369 = vpow.pop %v368
    %v370 = vsub.f32 %v367, 1.0
    %v371 = vsub.f32 %v369, 1.0
    %v372 = vsel %vm364, %v356, %v370
    %v373 = vsel %vm365, %v361, %v371
    %v374 = vlaneseq
    %v375 = vshrl.u32 %v374, 7
    %v376 = vsub.s32 0, %v375
    %v377 = vrot.slane %v99, %v376
    %378 = vmatprep.subr.mxu0 0.0
    %379 = vmatpush1.msra.mxu0 %v80
    %380 = vmatprep.subr.mxu0 0.0
    %381 = vmatpush1.msra.mxu0 %v81
    %382 = vmatprep.subr.mxu0 0.0
    %383 = vmatpush1.msra.mxu0 %v82
    %384 = vmatprep.subr.mxu0 0.0
    %385 = vmatpush1.msra.mxu0 %v83
    %386 = vmatprep.subr.mxu0 0.0
    %387 = vmatpush1.msra.mxu0 %v84
    %388 = vmatprep.subr.mxu0 0.0
    %389 = vmatpush1.msra.mxu0 %v85
    %390 = vmatprep.subr.mxu0 0.0
    %391 = vmatpush1.msra.mxu0 %v86
    %392 = vmatprep.subr.mxu0 0.0
    %393 = vmatpush1.msra.mxu0 %v87
    %394 = vmatprep.subr.mxu0 0.0
    %395 = vmatpush1.msra.mxu0 %v88
    %396 = vmatprep.subr.mxu0 0.0
    %397 = vmatpush1.msra.mxu0 %v89
    %398 = vmatprep.subr.mxu0 0.0
    %399 = vmatpush1.msra.mxu0 %v90
    %400 = vmatprep.subr.mxu0 0.0
    %401 = vmatpush1.msra.mxu0 %v91
    %402 = vmatprep.subr.mxu0 0.0
    %403 = vmatpush1.msra.mxu0 %v92
    %404 = vmatprep.subr.mxu0 0.0
    %405 = vmatpush1.msra.mxu0 %v93
    %406 = vmatprep.subr.mxu0 0.0
    %407 = vmatpush1.msra.mxu0 %v94
    %408 = vmatprep.subr.mxu0 0.0
    %409 = vmatpush1.msra.mxu0 %v95
    %410 = vmatprep.subr.mxu0 0.0
    %411 = vmatpush1.msra.mxu0 0.0
    %412 = vmatprep.subr.mxu0 0.0
    %413 = vmatpush1.msra.mxu0 0.0
    %414 = vmatprep.subr.mxu0 0.0
    %415 = vmatpush1.msra.mxu0 0.0
    %416 = vmatprep.subr.mxu0 0.0
    %417 = vmatpush1.msra.mxu0 0.0
    %418 = vmatprep.subr.mxu0 0.0
    %419 = vmatpush1.msra.mxu0 0.0
    %420 = vmatprep.subr.mxu0 0.0
    %421 = vmatpush1.msra.mxu0 0.0
    %422 = vmatprep.subr.mxu0 0.0
    %423 = vmatpush1.msra.mxu0 0.0
    %424 = vmatprep.subr.mxu0 0.0
    %425 = vmatpush1.msra.mxu0 0.0
    %426 = vmatprep.subr.mxu0 0.0
    %427 = vmatpush1.msra.mxu0 0.0
    %428 = vmatprep.subr.mxu0 0.0
    %429 = vmatpush1.msra.mxu0 0.0
    %430 = vmatprep.subr.mxu0 0.0
    %431 = vmatpush1.msra.mxu0 0.0
    %432 = vmatprep.subr.mxu0 0.0
    %433 = vmatpush1.msra.mxu0 0.0
    %434 = vmatprep.subr.mxu0 0.0
    %435 = vmatpush1.msra.mxu0 0.0
    %436 = vmatprep.subr.mxu0 0.0
    %437 = vmatpush1.msra.mxu0 0.0
    %438 = vmatprep.subr.mxu0 0.0
    %439 = vmatpush1.msra.mxu0 0.0
    %440 = vmatprep.subr.mxu0 0.0
    %441 = vmatpush1.msra.mxu0 0.0
    %442 = vmatprep.mubr.f32.mxu0 0.0
    %443 = vmatmul.mubr.f32.gmra.mrb[0].mxu0 %v372
    %v444 = vpop.f32.mrb[0].mxu0
    %v445 = vadd.f32 %v377, %v444
    %v446 = vpop.f32.mrb[0].mxu0
    %447 = vmatprep.mubr.f32.mxu0 0.0
    %448 = vmatmul.mubr.f32.gmra.mrb[0].mxu0 %v373
    %v449 = vpop.f32.mrb[0].mxu0
    %v450 = vadd.f32 %v377, %v449
    %v451 = vpop.f32.mrb[0].mxu0
    %452 = vdwg.mxu0
    %453 = vst [vmem:[#allocation7] sm:$0xff] %v445
    %454 = vst [vmem:[#allocation7 + $0x8] sm:$0xff] %v450
    // Predicated region
    $region18: #{tpu_custom_call.1} parent=1 // pred_check
      _
    $region19: #{tpu_custom_call.1} parent=1 // pred_check_branch
      %456 = sbr.rel (0) target = $region21
    $region20: #{tpu_custom_call.1} parent=1 // pred_region
      %s458 = ssub.s32 256, 256
      %459 = vsyncadd [#allocation4], %s458
      %s460 = sshll.u32 [#allocation7], 4
      %s461 = int_to_ptr.vmem [resolvable:$true] %s460
      %466 = dma.vmem_to_hbm [thread:$0]  %s461, 256, %s2, [#allocation4], 128, 128, 8
    $region21: #{tpu_custom_call.1} parent=1 // pred_fallthru
      _
    // Predicated region
    $region22: #{tpu_custom_call.1} parent=1 // pred_check
      _
    $region23: #{tpu_custom_call.1} parent=1 // pred_check_branch
      %468 = sbr.rel (0) target = $region25
    $region24: #{tpu_custom_call.1} parent=1 // pred_region
      %469 = dma.done [#allocation4], 256
    $region25: #{tpu_custom_call.1} parent=1 // pred_fallthru
      _
    %470 = vsyncpa [#allocation3], 1
    %471 = vsyncpa [#allocation6], 1
    %472 = vsyncpa [#allocation4], 1

</llo_original>
